<compile_context>
chip_gen: v5e
topology: v5e:2x2
jax: 0.10.0
libtpu: 0.0.40
codegen_flags: <defaults>
</compile_context>

<pallas_src>
import math
from functools import partial

import jax
import jax.numpy as jnp
import numpy as np
from jax.experimental import pallas as pl
from jax.experimental.pallas import tpu as pltpu


def _round_up(a, b):
    return (a + b - 1) // b * b


def _head_broadcast(v, F):
    # column c = f*H + h needs v[:, h].  A single concatenate op of F operands
    # is the proven-lowering form of this lane broadcast (jnp.tile lowers to a
    # (T,F,H)->(T,F*H) reshape that risks Mosaic shape-cast limits).  No MXU.
    return jnp.concatenate([v] * F, axis=-1)


# ---------------------------------------------------------------------------
# Pass 1: fused projection + attention.
#   s = X_blk @ [W | Wa2 | 0]            (bf16 MXU, f32 accumulate)
#   attn2 = z + sqrt(z^2 + 1),  z = s[:, FH:FH+H]
#   Y_blk = [ support0 * head_bcast(attn2) | attn2 | 0 ]   (stored bf16)
# ---------------------------------------------------------------------------
def _attn_kernel(x_ref, wcat_ref, y_ref, *, F, H, FH, Yc):
    xb = x_ref[...].astype(jnp.bfloat16)
    s = jnp.dot(xb, wcat_ref[...], preferred_element_type=jnp.float32)
    support0 = s[:, :FH]
    z = s[:, FH:FH + H]
    attn2 = z + jnp.sqrt(z * z + 1.0)
    attn_b = _head_broadcast(attn2, F)
    parts = [support0 * attn_b, attn2]
    if Yc > FH + H:
        # single lane-dense (unmasked) store of the whole (T, Yc) tile
        parts.append(jnp.zeros((s.shape[0], Yc - FH - H), jnp.float32))
    y_ref[...] = jnp.concatenate(parts, axis=-1).astype(y_ref.dtype)


# ---------------------------------------------------------------------------
# Pass 2: tiled propagation  acc = A @ Y  (reduction over A's column blocks),
# then per-head normalize (approx reciprocal) + bias on the last k step.
# ---------------------------------------------------------------------------
def _prop_kernel(adj_ref, y_ref, bias_ref, out_ref, acc_ref, *,
                 F, H, FH, Cout, n_valid, tk, mask_cols, y_sliced):
    k = pl.program_id(1)

    @pl.when(k == 0)
    def _():
        acc_ref[...] = jnp.zeros_like(acc_ref)

    a = adj_ref[...]
    if mask_cols:
        # Ragged last column block of the UNPADDED adjacency: zero the
        # out-of-range columns so stale VMEM can never pollute the reduction.
        col = k * tk + jax.lax.broadcasted_iota(jnp.int32, a.shape, 1)
        a = jnp.where(col < n_valid, a, jnp.zeros_like(a))
    a = a.astype(jnp.bfloat16)            # no-op if adj already arrives bf16

    if y_sliced:
        # Y is fully VMEM-resident (fetched once); take the k-th row slab.
        yb = y_ref[pl.ds(pl.multiple_of(k * tk, tk), tk), :]
    else:
        yb = y_ref[...]

    acc_ref[...] += jnp.dot(a, yb, preferred_element_type=jnp.float32)

    @pl.when(k == pl.num_programs(1) - 1)
    def _():
        acc = acc_ref[...]
        num = acc[:, :FH]                            # (T, FH)
        den = acc[:, FH:FH + H]                      # (T, H)
        inv = pl.reciprocal(den + 1e-9, approx=True)  # EUP, H-wide only
        res = num * _head_broadcast(inv, F)
        if Cout > FH:
            res = jnp.concatenate(
                [res, jnp.zeros((res.shape[0], Cout - FH), jnp.float32)],
                axis=-1)
        out_ref[...] = (res + bias_ref[...]).astype(out_ref.dtype)


def sgat_forward(x, adj, weight, a2, bias):
    """SGAT layer forward (eval mode).

    adj: dense (N, N) adjacency in any float dtype; bf16 is recommended since
    it is the dominant HBM stream (it is cast to bf16 for the MXU regardless).
    """
    N, Din = x.shape
    F, H = a2.shape
    FH = F * H
    assert weight.shape == (Din, FH)
    out_dtype = x.dtype

    # Fused projection weight: Wa2[d, h] = sum_f W[d, f*H + h] * a2[f, h],
    # so X @ [W | Wa2] yields support0 and the pre-nonlinearity attention.
    wa2 = jnp.einsum('dfh,fh->dh',
                     weight.reshape(Din, F, H).astype(jnp.float32),
                     a2.astype(jnp.float32))

    Yc = _round_up(FH + H, 128)     # lane-dense width of the propagated slab
    Cout = _round_up(FH, 128)       # lane-dense output width

    wcat = jnp.concatenate(
        [weight.astype(jnp.float32), wa2,
         jnp.zeros((Din, Yc - FH - H), jnp.float32)],
        axis=1).astype(jnp.bfloat16)
    bias_p = jnp.concatenate(
        [bias.reshape(1, FH).astype(jnp.float32),
         jnp.zeros((1, Cout - FH), jnp.float32)], axis=1)

    # ---- tiling -------------------------------------------------------------
    # Reduction tile over A's columns / Y's rows (lane dim of the A tile must
    # be a multiple of 128 or equal the full dim).
    TK = N if N <= 512 else 512
    n_k = -(-N // TK)
    NPY = n_k * TK                     # Y row count (>= N, multiple of TK)
    mask_cols = NPY != N               # ragged last column block of A

    # Row tile: keep >= 2 row blocks when possible (v7x megacore), cap at 512.
    TM = min(512, max(8, _round_up(-(-N // 2), 8)))
    n_i = -(-N // TM)
    n_rows_y = -(-NPY // TM)           # pass-1 row grid

    adj_bytes = jnp.dtype(adj.dtype).itemsize
    out_bytes = jnp.dtype(out_dtype).itemsize

    # Keep Y fully VMEM-resident in pass 2 when it fits (A then streams once).
    y_resident = 2 * NPY * Yc * 2 <= 12 * 1024 * 1024
    y_rows_blk = NPY if y_resident else TK
    y_sliced = y_resident and n_k > 1

    # Explicit VMEM budget (double-buffered blocks + f32 accumulator), capped
    # at 48 MiB so the same tiling is safe on v7x's 64 MiB VMEM.
    vmem_need = (2 * TM * TK * adj_bytes
                 + 2 * y_rows_blk * Yc * 2
                 + 2 * TM * Cout * out_bytes
                 + TM * Yc * 4
                 + 2 * Cout * 4)
    vmem_limit = int(min(max(2 * vmem_need, 32 * 1024 * 1024),
                         48 * 1024 * 1024))

    # Cheap O(N*Din) row pad of x (the O(N^2) adjacency pad is gone).  The pad
    # rows of Y are finite (attn2 -> 1) and the in-kernel column mask on A
    # keeps them out of the reduction.
    if NPY == N:
        x_p = x.astype(jnp.bfloat16)
    else:
        x_p = jnp.zeros((NPY, Din), jnp.bfloat16).at[:N, :].set(
            x.astype(jnp.bfloat16))

    # ---- pass 1: Y = [support0 * attn | attn2 | 0]  (bf16) ------------------
    y = pl.pallas_call(
        partial(_attn_kernel, F=F, H=H, FH=FH, Yc=Yc),
        grid_spec=pltpu.PrefetchScalarGridSpec(
            num_scalar_prefetch=0,
            grid=(n_rows_y,),
            in_specs=[
                pl.BlockSpec((TM, Din), lambda i: (i, 0)),
                pl.BlockSpec((Din, Yc), lambda i: (0, 0)),
            ],
            out_specs=pl.BlockSpec((TM, Yc), lambda i: (i, 0)),
        ),
        out_shape=jax.ShapeDtypeStruct((NPY, Yc), jnp.bfloat16),
        compiler_params=pltpu.CompilerParams(
            dimension_semantics=("parallel",),
            vmem_limit_bytes=vmem_limit),
        cost_estimate=pl.CostEstimate(
            flops=2 * NPY * Din * Yc + 4 * NPY * FH,
            transcendentals=NPY * H,
            bytes_accessed=2 * (NPY * Din + Din * Yc + NPY * Yc)),
    )(x_p, wcat)

    # ---- pass 2: out = (A @ Y).num * rcp((A @ Y).den + 1e-9) + bias ---------
    if y_resident:
        y_spec = pl.BlockSpec((NPY, Yc), lambda i, k: (0, 0))   # fetched once
    else:
        y_spec = pl.BlockSpec((TK, Yc), lambda i, k: (k, 0))

    out = pl.pallas_call(
        partial(_prop_kernel, F=F, H=H, FH=FH, Cout=Cout,
                n_valid=N, tk=TK, mask_cols=mask_cols, y_sliced=y_sliced),
        grid_spec=pltpu.PrefetchScalarGridSpec(
            num_scalar_prefetch=0,
            grid=(n_i, n_k),
            in_specs=[
                pl.BlockSpec((TM, TK), lambda i, k: (i, k)),     # A tile
                y_spec,                                          # Y
                pl.BlockSpec((1, Cout), lambda i, k: (0, 0)),    # bias
            ],
            out_specs=pl.BlockSpec((TM, Cout), lambda i, k: (i, 0)),
            scratch_shapes=[pltpu.VMEM((TM, Yc), jnp.float32)],
        ),
        out_shape=jax.ShapeDtypeStruct((N, Cout), out_dtype),
        compiler_params=pltpu.CompilerParams(
            dimension_semantics=("parallel", "arbitrary"),
            vmem_limit_bytes=vmem_limit),
        cost_estimate=pl.CostEstimate(
            flops=2 * N * N * Yc + 3 * N * FH,
            transcendentals=N * H,
            bytes_accessed=(N * N * adj_bytes
                            + NPY * Yc * 2 * (1 if y_resident else n_i)
                            + N * Cout * out_bytes + Cout * 4)),
    )(adj, y, bias_p)

    return out[:, :FH]


def sgat_reference(x, adj, weight, a2, bias):
    """Pure-JAX (f32) transcription of the PyTorch forward (eval mode)."""
    N = x.shape[0]
    F, H = a2.shape
    support0 = (x @ weight).reshape(N, F, H)
    ones = jnp.ones((N, 1, H), x.dtype)
    support = jnp.concatenate([support0 * ones, ones], axis=1)          # (N, F+1, H)
    attn2 = jnp.einsum('aij,ij->aj', support[:, :-1, :], a2)
    attn2 = attn2 + jnp.sqrt(attn2 * attn2 + 1.0)
    attn_support = jnp.einsum('aij,aj->aij', support, attn2).reshape(N, -1)
    attn_support = adj @ attn_support                                    # pre_attn_order = 1
    support = attn_support.reshape(N, F + 1, H)                          # post_attn_order = 1
    output = support[:, :-1, :] / (support[:, -1:, :] + 1e-9)
    output = output + bias
    return output.reshape(N, -1)


if __name__ == "__main__":
    # Small, module-consistent shapes.
    N = 16            # number of graph nodes
    in_features = 32
    out_features = 4
    n_head = 8

    key = jax.random.PRNGKey(0)
    k_x, k_adj, k_w, k_a2, k_b = jax.random.split(key, 5)

    x = jax.random.normal(k_x, (N, in_features), dtype=jnp.float32)

    # Dense nonnegative adjacency with self loops (sparse adj densified).
    adj = jax.random.uniform(k_adj, (N, N), dtype=jnp.float32)
    adj = jnp.where(adj > 0.6, adj, 0.0) + jnp.eye(N, dtype=jnp.float32)

    # Deterministic Xavier-normal-style parameter init (matching __init__ shapes).
    std_w = 1.414 * math.sqrt(2.0 / (in_features + out_features * n_head))
    weight = std_w * jax.random.normal(k_w, (in_features, out_features * n_head),
                                       dtype=jnp.float32)
    std_a2 = 1.414 * math.sqrt(2.0 / (out_features + n_head))
    a2 = std_a2 * jax.random.normal(k_a2, (out_features, n_head), dtype=jnp.float32)
    std_b = 1.414 * math.sqrt(2.0 / (out_features * n_head + n_head))
    bias = std_b * jax.random.normal(k_b, (1, out_features, n_head), dtype=jnp.float32)

    # adj is the dominant HBM stream of pass 2 -> feed it in bf16 (perf review).
    out = sgat_forward(x, adj.astype(jnp.bfloat16), weight, a2, bias)
    out = jax.block_until_ready(out)

    ref = sgat_reference(x, adj, weight, a2, bias)
    # bf16 MXU operands (adj, Y, fused weight) + approx reciprocal ->
    # bf16-level tolerance (the previous f32 path matched at 1e-4).
    np.testing.assert_allclose(np.asarray(out), np.asarray(ref),
                               rtol=5e-2, atol=5e-2)

    print("KERNEL_OK")
</pallas_src>

<mosaic_0001>
module attributes {stable_mosaic.version = 11 : i64} {
  func.func @_attn_kernel(%arg0: i32, %arg1: memref<8x32xbf16, #tpu.memory_space<vmem>>, %arg2: memref<32x128xbf16, #tpu.memory_space<vmem>>, %arg3: memref<8x128xbf16, #tpu.memory_space<vmem>>) attributes {dimension_semantics = [#tpu.dimension_semantics<parallel>], iteration_bounds = array<i64: 2>, scalar_prefetch = 0 : i64, scratch_operands = 0 : i64, tpu.core_type = #tpu.core_type<tc>, window_params = [{transform_indices = @transform_0, window_bounds = array<i64: 8, 32>}, {pipeline_mode = #tpu.pipeline_mode<synchronous>, transform_indices = @transform_1, window_bounds = array<i64: 32, 128>}, {transform_indices = @transform_2, window_bounds = array<i64: 8, 128>}]} {
    %c0 = arith.constant 0 : index
    %c0_0 = arith.constant 0 : index
    %0 = vector.load %arg1[%c0, %c0_0] : memref<8x32xbf16, #tpu.memory_space<vmem>>, vector<8x32xbf16>
    %c0_1 = arith.constant 0 : index
    %c0_2 = arith.constant 0 : index
    %1 = vector.load %arg2[%c0_1, %c0_2] : memref<32x128xbf16, #tpu.memory_space<vmem>>, vector<32x128xbf16>
    %cst = arith.constant dense<0.000000e+00> : vector<8x128xf32>
    %2 = tpu.matmul %0, %1, %cst {dimension_numbers = #tpu.dot_dimension_numbers<[1], [0], [0], [1], [0, 0, 1, 1], [], []>} : vector<8x32xbf16>, vector<32x128xbf16>, vector<8x128xf32> -> vector<8x128xf32>
    %3 = vector.extract_strided_slice %2 {offsets = [0, 0], sizes = [8, 32], strides = [1, 1]} : vector<8x128xf32> to vector<8x32xf32>
    %4 = vector.extract_strided_slice %2 {offsets = [0, 32], sizes = [8, 8], strides = [1, 1]} : vector<8x128xf32> to vector<8x8xf32>
    %5 = arith.mulf %4, %4 : vector<8x8xf32>
    %cst_3 = arith.constant 1.000000e+00 : f32
    %6 = vector.broadcast %cst_3 : f32 to vector<8x8xf32>
    %7 = arith.addf %5, %6 : vector<8x8xf32>
    %8 = math.sqrt %7 : vector<8x8xf32>
    %9 = arith.addf %4, %8 : vector<8x8xf32>
    %10 = tpu.concatenate %9, %9, %9, %9 in 1 : vector<8x8xf32>, vector<8x8xf32>, vector<8x8xf32>, vector<8x8xf32> -> vector<8x32xf32>
    %11 = arith.mulf %3, %10 : vector<8x32xf32>
    %cst_4 = arith.constant 0.000000e+00 : f32
    %12 = vector.broadcast %cst_4 : f32 to vector<8x88xf32>
    %13 = tpu.concatenate %11, %9, %12 in 1 : vector<8x32xf32>, vector<8x8xf32>, vector<8x88xf32> -> vector<8x128xf32>
    %14 = arith.truncf %13 : vector<8x128xf32> to vector<8x128xbf16>
    %c0_5 = arith.constant 0 : index
    %c0_6 = arith.constant 0 : index
    %15 = vector.load %arg3[%c0_5, %c0_6] : memref<8x128xbf16, #tpu.memory_space<vmem>>, vector<8x128xbf16>
    tpu.vector_store %arg3[%c0_5, %c0_6], %14 {strides = array<i32>} : memref<8x128xbf16, #tpu.memory_space<vmem>>, vector<8x128xbf16>,
    return
  }
  func.func @transform_0(%arg0: i32) -> (i32, i32) {
    %c0_i32 = arith.constant 0 : i32
    %c0_i32_0 = arith.constant 0 : i32
    return %arg0, %c0_i32 : i32, i32
  }
  func.func @transform_1(%arg0: i32) -> (i32, i32) {
    %c0_i32 = arith.constant 0 : i32
    %c0_i32_0 = arith.constant 0 : i32
    %c0_i32_1 = arith.constant 0 : i32
    return %c0_i32, %c0_i32_0 : i32, i32
  }
  func.func @transform_2(%arg0: i32) -> (i32, i32) {
    %c0_i32 = arith.constant 0 : i32
    %c0_i32_0 = arith.constant 0 : i32
    return %arg0, %c0_i32 : i32, i32
  }
}

</mosaic_0001>

<llo_original>
// kernel: tpu_custom_call.1
$region0: #{tpu_custom_call.1}
  #allocation0 [shape = 'u32[]', space=smem, size = 0x4, offset = 0x4, fixed_abs, tag = 'smem constant byte address 0x4 - core index']
  #allocation1 [shape = 'u32[72,128]{1,0:T(1,128)}', space=vmem, size = 0x9000, scoped, tag = 'internal scratch']
  %s0 = inlined_call_operand.hbm [shape: bf16[16,32], index: 0, kind: input, shape index: {}]
  %s1 = inlined_call_operand.hbm [shape: bf16[32,128], index: 1, kind: input, shape index: {}]
  %s2 = inlined_call_operand.hbm [shape: bf16[16,128], index: 2, kind: output, shape index: {}]
  %s3 = sld [smem:[#allocation0]]
  $region49: #{tpu_custom_call.1} parent=0
    _
  %s5 = ssub.s32 1, %s3
  %s6 = scalar_select 0, %s5, %s3
  $region1: #{tpu_custom_call.1} parent=0
    #allocation2 [shape = 'u8[4096]{0}', space=vmem, size = 0x1000, scoped, tag = 'input window, operand 0']
    #allocation3 [shape = 's32[2]{0}', space=sflag, size = 0x8, scoped, tag = 'scoped memory for tpu_custom_call.1']
    #allocation4 [shape = 's32[2]{0}', space=sflag, size = 0x8, scoped, tag = 'scoped memory for tpu_custom_call.1']
    #allocation5 [shape = 'u8[8192]{0}', space=vmem, size = 0x2000, scoped, tag = 'input window, operand 1, single buffered']
    #allocation6 [shape = 's32[1]{0}', space=sflag, size = 0x4, scoped, tag = 'scoped memory for tpu_custom_call.1']
    #allocation7 [shape = 'u8[4096]{0}', space=vmem, size = 0x1000, scoped, tag = 'output window, operand 0']
    %7 = vsyncpa [#allocation3], 0
    %s8 = scalar_lea.sflag [#allocation3], 1
    %9 = vsyncpa %s8, 0
    %10 = vsyncpa [#allocation6], 0
    %11 = vsyncpa [#allocation4], 0
    %s12 = scalar_lea.sflag [#allocation4], 1
    %13 = vsyncpa %s12, 0
    loop: start=0, step=1, limit=4
    $region2: #{tpu_custom_call.1} parent=1 // loop_pre_header
      _
    $region3: #{tpu_custom_call.1} parent=1 // loop_header
      %s15 = sphi 0, %s19
      %p16 = scmp.ge.s32.totalorder %s15, 4
      %s25 = sphi 0, %s27
      %s28 = sphi 0, %s25
      %s29 = sphi 0, %s28
      %s45 = sphi 0, %s29
      %s49 = sphi 0, %s49
      %s51 = sphi 0, %s49
      %s52 = sphi 0, %s51
      %s66 = sphi 0, %s52
      %s72 = sphi 0, %s74
      %s75 = sphi 0, %s72
      %s76 = sphi 0, %s75
      %s92 = sphi 0, %s76
    $region4: #{tpu_custom_call.1} parent=1 // loop_header_branch
      %18 = sbr.rel (%p16) target = $region8
    $region5: #{tpu_custom_call.1} parent=1 // loop_body
      %s20 = ssub.s32 %s15, 1
      %s21 = ssub.s32 %s15, 2
      %s22 = sadd.s32 %s15, 1
      %s23 = ssub.s32 %s15, %s22
      %p24 = scmp.eq.s32.totalorder %s23, 0
      %s26 = sadd.s32 %s25, 1
      %s27 = scalar_select %p24, %s25, %s26
      %p30 = pneg %p24
      %p31 = scmp.eq.s32.totalorder %s15, 1
      %p32 = por %p30, %p31
      %p33 = scmp.ne.s32.totalorder %s25, %s28
      %p34 = scmp.eq.s32.totalorder %s15, 0
      %p35 = por %p33, %p34
      %p36 = scmp.ne.s32.totalorder %s25, %s28
      %p37 = scmp.eq.s32.totalorder %s20, 1
      %p38 = por %p36, %p37
      %p39 = scmp.ne.s32.totalorder %s28, %s29
      %p40 = scmp.eq.s32.totalorder %s20, 0
      %p41 = por %p39, %p40
      %p42 = scmp.ne.s32.totalorder %s28, %s29
      %p43 = scmp.eq.s32.totalorder %s21, 1
      %p44 = por %p42, %p43
      %p46 = scmp.ne.s32.totalorder %s29, %s45
      %p47 = scmp.eq.s32.totalorder %s21, 0
      %p48 = por %p46, %p47
      %s50 = sadd.s32 %s49, 1
      %p53 = scmp.eq.s32.totalorder %s15, 1
      %p54 = scmp.ne.s32.totalorder %s49, %s51
      %p55 = scmp.eq.s32.totalorder %s15, 0
      %p56 = por %p54, %p55
      %p57 = scmp.ne.s32.totalorder %s49, %s51
      %p58 = scmp.eq.s32.totalorder %s20, 1
      %p59 = por %p57, %p58
      %p60 = scmp.ne.s32.totalorder %s51, %s52
      %p61 = scmp.eq.s32.totalorder %s20, 0
      %p62 = por %p60, %p61
      %p63 = scmp.ne.s32.totalorder %s51, %s52
      %p64 = scmp.eq.s32.totalorder %s21, 1
      %p65 = por %p63, %p64
      %p67 = scmp.ne.s32.totalorder %s52, %s66
      %p68 = scmp.eq.s32.totalorder %s21, 0
      %p69 = por %p67, %p68
      %s70 = ssub.s32 %s15, %s22
      %p71 = scmp.eq.s32.totalorder %s70, 0
      %s73 = sadd.s32 %s72, 1
      %s74 = scalar_select %p71, %s72, %s73
      %p77 = pneg %p71
      %p78 = scmp.eq.s32.totalorder %s15, 1
      %p79 = por %p77, %p78
      %p80 = scmp.ne.s32.totalorder %s72, %s75
      %p81 = scmp.eq.s32.totalorder %s15, 0
      %p82 = por %p80, %p81
      %p83 = scmp.ne.s32.totalorder %s72, %s75
      %p84 = scmp.eq.s32.totalorder %s20, 1
      %p85 = por %p83, %p84
      %p86 = scmp.ne.s32.totalorder %s75, %s76
      %p87 = scmp.eq.s32.totalorder %s20, 0
      %p88 = por %p86, %p87
      %p89 = scmp.ne.s32.totalorder %s75, %s76
      %p90 = scmp.eq.s32.totalorder %s21, 1
      %p91 = por %p89, %p90
      %p93 = scmp.ne.s32.totalorder %s76, %s92
      %p94 = scmp.eq.s32.totalorder %s21, 0
      %p95 = por %p93, %p94
      %p96 = scmp.le.s32.totalorder 1, %s15
      %p97 = scmp.lt.s32.totalorder %s15, 3
      %p98 = pnand %p96, %p97
      %p99 = pneg %p98
      // Predicated region
      $region9: #{tpu_custom_call.1} parent=5 // pred_check
        _
      $region10: #{tpu_custom_call.1} parent=5 // pred_check_branch
        %101 = sbr.rel (%p98) target = $region12
      $region11: #{tpu_custom_call.1} parent=5 // pred_region
        %s102 = ssub.s32 %s15, 1
        // Predicated region
        $region13: #{tpu_custom_call.1} parent=11 // pred_check
          %p103 = pneg %p62
        $region14: #{tpu_custom_call.1} parent=11 // pred_check_branch
          %105 = sbr.rel (%p103) target = $region16
        $region15: #{tpu_custom_call.1} parent=11 // pred_region
          %107 = vsyncadd [#allocation6], 0
          %s108 = sshll.u32 %s1, 4
          %s109 = int_to_ptr.hbm [resolvable:$true] %s108
          %s110 = sshll.u32 [#allocation5], 4
          %s111 = int_to_ptr.vmem [resolvable:$true] %s110
          %116 = dma.hbm_to_vmem [thread:$0]  %s109, 256, %s111, [#allocation6], 64, 64, 4
        $region16: #{tpu_custom_call.1} parent=11 // pred_fallthru
          _
      $region12: #{tpu_custom_call.1} parent=5 // pred_fallthru
        _
      %p117 = scmp.lt.s32.totalorder %s15, 2
      // Predicated region
      $region17: #{tpu_custom_call.1} parent=5 // pred_check
        %p118 = pneg %p117
      $region18: #{tpu_custom_call.1} parent=5 // pred_check_branch
        %120 = sbr.rel (%p118) target = $region20
      $region19: #{tpu_custom_call.1} parent=5 // pred_region
        // Predicated region
        $region21: #{tpu_custom_call.1} parent=19 // pred_check
          %p121 = pneg %p35
        $region22: #{tpu_custom_call.1} parent=19 // pred_check_branch
          %123 = sbr.rel (%p121) target = $region24
        $region23: #{tpu_custom_call.1} parent=19 // pred_region
          %s124 = sand.u32 %s25, 1
          %s125 = scalar_lea.sflag [#allocation3], %s124
          %s126 = sand.u32 %s25, 1
          %s127 = smul.addr %s126, 4
          %s128 = scalar_lea.vmem [#allocation2], %s127
          %130 = vsyncadd %s125, 0
          %s131 = smul.addr %s15, 4
          %s132 = scalar_lea.hbm %s0, %s131
          %s134 = sshll.u32 %s132, 4
          %s135 = int_to_ptr.hbm [resolvable:$true] %s134
          %s136 = sshll.u32 %s128, 4
          %s137 = int_to_ptr.vmem [resolvable:$true] %s136
          %139 = dma.hbm_to_vmem [thread:$0]  %s135, 64, %s137, %s125
        $region24: #{tpu_custom_call.1} parent=19 // pred_fallthru
          _
      $region20: #{tpu_custom_call.1} parent=5 // pred_fallthru
        _
      %p140 = scmp.le.s32.totalorder 1, %s15
      %p141 = scmp.lt.s32.totalorder %s15, 3
      %p142 = pnand %p140, %p141
      %p143 = pneg %p142
      // Predicated region
      $region25: #{tpu_custom_call.1} parent=5 // pred_check
        _
      $region26: #{tpu_custom_call.1} parent=5 // pred_check_branch
        %145 = sbr.rel (%p142) target = $region28
      $region27: #{tpu_custom_call.1} parent=5 // pred_region
        %s146 = ssub.s32 %s15, 1
        %s147 = sand.u32 %s28, 1
        %s148 = scalar_lea.sflag [#allocation3], %s147
        %s149 = sand.u32 %s28, 1
        %s150 = smul.addr %s149, 4
        %s151 = scalar_lea.vmem [#allocation2], %s150
        // Predicated region
        $region29: #{tpu_custom_call.1} parent=27 // pred_check
          %p152 = pneg %p41
        $region30: #{tpu_custom_call.1} parent=27 // pred_check_branch
          %154 = sbr.rel (%p152) target = $region32
        $region31: #{tpu_custom_call.1} parent=27 // pred_region
          %156 = dma.done %s148, 64
        $region32: #{tpu_custom_call.1} parent=27 // pred_fallthru
          _
        // Predicated region
        $region33: #{tpu_custom_call.1} parent=27 // pred_check
          %p157 = pneg %p62
        $region34: #{tpu_custom_call.1} parent=27 // pred_check_branch
          %159 = sbr.rel (%p157) target = $region36
        $region35: #{tpu_custom_call.1} parent=27 // pred_region
          %161 = dma.done [#allocation6], 256
        $region36: #{tpu_custom_call.1} parent=27 // pred_fallthru
          _
        %s162 = sand.u32 %s28, 1
        %s163 = scalar_lea.sflag [#allocation3], %s162
        %s164 = sand.u32 %s28, 1
        %s165 = smul.addr %s164, 4
        %s166 = scalar_lea.vmem [#allocation2], %s165
        %p167 = pneg %p41
        %p168 = pneg %p38
        %p169 = pneg %p62
        %p170 = pneg %p59
        %p171 = pneg %p88
        %p172 = pneg %p85
        %s173 = sand.u32 %s75, 1
        %s174 = scalar_lea.sflag [#allocation4], %s173
        %s175 = sand.u32 %s75, 1
        %s176 = smul.addr %s175, 4
        %s177 = scalar_lea.vmem [#allocation7], %s176
        %v179 = vld [vmem:[%s151] sm:$0xf]
        %v180 = vld [vmem:[#allocation5] sm:$0xf]
        %v181 = vld [vmem:[#allocation5 + $0x4] sm:$0xf]
        %v182 = vld [vmem:[#allocation5 + $0x8] sm:$0xf]
        %v183 = vld [vmem:[#allocation5 + $0xc] sm:$0xf]
        %v188 = vunpack.c.l.b16 %v180
        %v189 = vunpack.c.l.b16 %v181
        %v190 = vunpack.c.l.b16 %v182
        %v191 = vunpack.c.l.b16 %v183
        %v192 = vpack.c.b16 %v189, %v188
        %v193 = vpack.c.b16 %v191, %v190
        %vm196 = vcmask 261120
        %v198 = vsel %vm196, %v179, 0
        %200 = vmatpush.bf16.msra.mxu0 0
        %201 = vmatpush.bf16.msra.mxu0 0
        %202 = vmatpush.bf16.msra.mxu0 0
        %203 = vmatpush.bf16.msra.mxu0 0
        %204 = vmatpush.bf16.msra.mxu0 0
        %205 = vmatpush.bf16.msra.mxu0 0
        %206 = vmatpush.bf16.msra.mxu0 %v193
        %207 = vmatpush.bf16.msra.mxu0 %v192
        %208 = vmatmul.bf16.gmra.mxu0 %v198
        %v209 = vpop.f32.mrf.mxu0
        %v210 = vadd.f32 0.0, %v209
        %v211 = vpop.f32.mrf.mxu0
        %212 = vdwg.mxu0
        %v213 = vmul.f32 %v210, %v210
        %v214 = vadd.f32 %v213, 1.0
        %v215 = vrsqrt.pop %v214
        %v216 = vmul.f32 %v215, %v214
        %v217 = vmul.f32 %v216, %v215
        %v218 = vmul.f32 0.5, %v217
        %v219 = vsub.f32 1.5, %v218
        %v220 = vmul.f32 %v215, %v219
        %v221 = vmul.f32 %v214, %v220
        %vm222 = vcmp.eq.f32.partialorder %v214, inf
        %v223 = vsel %vm222, %v214, %v221
        %vm224 = vcmp.eq.f32.partialorder %v214, 0.0
        %v225 = vand.u32 %v214, 2147483648
        %v226 = vsel %vm224, %v225, %v223
        %v227 = vadd.f32 %v210, %v226
        %229 = vrot.lane.b32.xlu0 %v227, 96
        %v230 = vpop.permute.xlu0 %229
        %232 = vrot.lane.b32.xlu0 %v227, 104
        %v233 = vpop.permute.xlu0 %232
        %235 = vrot.lane.b32.xlu0 %v227, 112
        %v236 = vpop.permute.xlu0 %235
        %238 = vrot.lane.b32.xlu0 %v227, 120
        %v239 = vpop.permute.xlu0 %238
        %vm241 = vcmask 64512
        %v242 = vsel %vm241, %v230, %v233
        %vm243 = vcmask 130048
        %v244 = vsel %vm243, %v242, %v236
        %vm245 = vcmask 195584
        %v246 = vsel %vm245, %v244, %v239
        %v247 = vmul.f32 %v210, %v246
        %v248 = vsel %vm196, %v247, %v227
        %vm249 = vcmask 326656
        %v250 = vsel %vm249, %v248, 0.0
        %v251 = vpack.c.bf16 %v250, %v250
        %252 = vst [vmem:[%s177] sm:$0xf] %v251
        %s253 = sand.u32 %s75, 1
        %s254 = scalar_lea.sflag [#allocation4], %s253
        %s255 = sand.u32 %s75, 1
        %s256 = smul.addr %s255, 4
        %s257 = scalar_lea.vmem [#allocation7], %s256
        // Predicated region
        $region37: #{tpu_custom_call.1} parent=27 // pred_check
          %p258 = pneg %p85
        $region38: #{tpu_custom_call.1} parent=27 // pred_check_branch
          %260 = sbr.rel (%p258) target = $region40
        $region39: #{tpu_custom_call.1} parent=27 // pred_region
          %262 = vsyncadd %s254, 0
          %s263 = smul.addr %s20, 4
          %s264 = scalar_lea.hbm %s2, %s263
          %s266 = sshll.u32 %s257, 4
          %s267 = int_to_ptr.vmem [resolvable:$true] %s266
          %s268 = sshll.u32 %s264, 4
          %s269 = int_to_ptr.hbm [resolvable:$true] %s268
          %271 = dma.vmem_to_hbm [thread:$0]  %s267, 64, %s269, %s254
        $region40: #{tpu_custom_call.1} parent=27 // pred_fallthru
          _
      $region28: #{tpu_custom_call.1} parent=5 // pred_fallthru
        _
      %p272 = scmp.le.s32.totalorder 2, %s15
      // Predicated region
      $region41: #{tpu_custom_call.1} parent=5 // pred_check
        %p273 = pneg %p272
      $region42: #{tpu_custom_call.1} parent=5 // pred_check_branch
        %275 = sbr.rel (%p273) target = $region44
      $region43: #{tpu_custom_call.1} parent=5 // pred_region
        %s276 = ssub.s32 %s15, 2
        // Predicated region
        $region45: #{tpu_custom_call.1} parent=43 // pred_check
          %p277 = pneg %p91
        $region46: #{tpu_custom_call.1} parent=43 // pred_check_branch
          %279 = sbr.rel (%p277) target = $region48
        $region47: #{tpu_custom_call.1} parent=43 // pred_region
          %s280 = sand.u32 %s76, 1
          %s281 = scalar_lea.sflag [#allocation4], %s280
          %s282 = sand.u32 %s76, 1
          %s283 = smul.addr %s282, 4
          %s284 = scalar_lea.vmem [#allocation7], %s283
          %286 = dma.done %s281, 64
        $region48: #{tpu_custom_call.1} parent=43 // pred_fallthru
          _
      $region44: #{tpu_custom_call.1} parent=5 // pred_fallthru
        _
    $region6: #{tpu_custom_call.1} parent=1 // loop_footer
      %s19 = sadd.s32 1, %s15
    $region7: #{tpu_custom_call.1} parent=1 // loop_footer_branch
      %14 = sbr.rel target = $region3
    $region8: #{tpu_custom_call.1} parent=1 // loop_exit
      _
    %287 = vsyncpa [#allocation3], 1
    %s288 = scalar_lea.sflag [#allocation3], 1
    %289 = vsyncpa %s288, 1
    %290 = vsyncpa [#allocation6], 1
    %291 = vsyncpa [#allocation4], 1
    %s292 = scalar_lea.sflag [#allocation4], 1
    %293 = vsyncpa %s292, 1

</llo_original>
